<compile_context>
chip_gen: v7x
topology: tpu7x:2x2x1
jax: 0.10.0
libtpu: 0.0.40
codegen_flags: <defaults>
</compile_context>

<pallas_src>
import functools

import jax
import jax.numpy as jnp
from jax.experimental import pallas as pl
from jax.experimental.pallas import tpu as pltpu


# --------------------------------------------------------------------------
# Kernels
# --------------------------------------------------------------------------
def _epilogue(h_f32, o_ref, block_n):
    """h_f32: (block_m, 2*block_n) f32 = [pre-relu | pre-sigmoid]."""
    h1 = h_f32[:, :block_n]          # relu half   (lane-aligned slice)
    h2 = h_f32[:, block_n:]          # sigmoid half
    y = jnp.maximum(h1, 0.0)
    g = 0.5 * (jnp.tanh(0.5 * h2) + 1.0)   # == sigmoid(h2); single EUP op
    o_ref[...] = (y * g).astype(o_ref.dtype)


def _gated_mlp_kernel(x_ref, w_ref, b_ref, o_ref, *, block_n):
    """Single-K-block path: one fused MXU pass + epilogue."""
    h = jnp.dot(x_ref[...], w_ref[...],
                preferred_element_type=jnp.float32) + b_ref[...]
    _epilogue(h, o_ref, block_n)


def _gated_mlp_kernel_ktiled(x_ref, w_ref, b_ref, o_ref, acc_ref, *, block_n):
    """K-tiled path: f32 accumulator, bias/relu/gate fused into last k step."""
    k = pl.program_id(2)

    @pl.when(k == 0)
    def _init():
        acc_ref[...] = jnp.zeros_like(acc_ref)

    acc_ref[...] += jnp.dot(x_ref[...], w_ref[...],
                            preferred_element_type=jnp.float32)

    @pl.when(k == pl.num_programs(2) - 1)
    def _finalize():
        _epilogue(acc_ref[...] + b_ref[...], o_ref, block_n)


# --------------------------------------------------------------------------
# Tiling / VMEM helpers
# --------------------------------------------------------------------------
def _vmem_capacity_bytes():
    try:
        cap = getattr(pltpu.get_tpu_info(), "vmem_capacity_bytes", None)
        if cap:
            return int(cap)
    except Exception:
        pass
    return 64 * 1024 * 1024   # conservative fallback (v7x physical VMEM)


def _choose_tiles(M, in_dim, block_n, c_bytes, o_bytes, budget, block_k=None):
    """Pick (block_m, block_k) fitting `budget`, accounting for f32 temps."""
    two_bn = 2 * block_n

    def w_tile_bytes(bk):                      # fused-W tile, double-buffered
        return 2 * bk * two_bn * c_bytes

    if block_k is None:
        block_k = in_dim
        if w_tile_bytes(in_dim) > budget // 3:
            for cand in (4096, 2048, 1024, 512, 256, 128):
                if (cand < in_dim and in_dim % cand == 0
                        and w_tile_bytes(cand) <= budget // 3):
                    block_k = cand
                    break

    fixed = w_tile_bytes(block_k) + 2 * two_bn * 4      # W bufs + bias bufs
    per_row = (2 * block_k * c_bytes        # x tile, double buffered
               + 2 * block_n * o_bytes      # output tile, double buffered
               + two_bn * 4                 # f32 accumulator / MXU result
               + 2 * two_bn * 4)            # relu/gate f32 temporaries
    align = 16 if c_bytes == 2 else 8

    avail = budget - fixed
    bm = align
    if avail > per_row * align:
        bm = (avail // per_row) // align * align
    bm = max(align, min(bm, 1024))          # 512-1024 rows ~ HBM-roofline knee
    if M <= bm:
        bm = M                              # full-dim block is always legal
    return int(bm), int(block_k)


# --------------------------------------------------------------------------
# Weight prep (run ONCE per set of weights, e.g. at load time)
# --------------------------------------------------------------------------
def prepare_gated_mlp(w1, b1, w2, b2, *, block_n=None,
                      compute_dtype=jnp.bfloat16):
    """Fuse/pad/cast weights once.

    w1, w2: (in_dim, out_dim) — pre-transposed relative to torch.nn.Linear's
    (out, in) storage.  b1, b2: (out_dim,).
    """
    in_dim, out_dim = w1.shape
    assert w2.shape == (in_dim, out_dim)

    out_dim_p = ((out_dim + 127) // 128) * 128      # lane-dense output
    if block_n is None:
        block_n = 256 if (out_dim_p >= 1024 and out_dim_p % 256 == 0) else 128
        block_n = min(block_n, out_dim_p)
    assert out_dim_p % block_n == 0
    n_tiles = out_dim_p // block_n

    pad = out_dim_p - out_dim
    if pad:
        # Zero-padded columns: relu(0)*sigmoid(0) = 0, sliced off afterwards.
        w1 = jnp.pad(w1, ((0, 0), (0, pad)))
        w2 = jnp.pad(w2, ((0, 0), (0, pad)))
        b1 = jnp.pad(b1, (0, pad))
        b2 = jnp.pad(b2, (0, pad))

    # Per N-tile column layout: [W1_j | W2_j]  -> one MXU pass per tile.
    w1r = w1.reshape(in_dim, n_tiles, block_n)
    w2r = w2.reshape(in_dim, n_tiles, block_n)
    w_fused = jnp.stack([w1r, w2r], axis=2).reshape(
        in_dim, n_tiles * 2 * block_n).astype(compute_dtype)
    b_fused = jnp.stack([b1.reshape(n_tiles, block_n),
                         b2.reshape(n_tiles, block_n)], axis=1).reshape(
        1, n_tiles * 2 * block_n).astype(jnp.float32)

    return {
        "w": w_fused, "b": b_fused,
        "in_dim": in_dim, "out_dim": out_dim, "out_dim_p": out_dim_p,
        "block_n": int(block_n), "n_tiles": int(n_tiles),
        "compute_dtype": jnp.dtype(compute_dtype),
    }


# --------------------------------------------------------------------------
# Apply
# --------------------------------------------------------------------------
def gated_mlp_apply(x, params, *, block_m=None, block_k=None):
    """relu(x @ W1 + b1) * sigmoid(x @ W2 + b2) with prepared params."""
    in_dim = params["in_dim"]
    out_dim = params["out_dim"]
    out_dim_p = params["out_dim_p"]
    block_n = params["block_n"]
    n_tiles = params["n_tiles"]
    c_dtype = params["compute_dtype"]
    w, b = params["w"], params["b"]

    assert x.shape[-1] == in_dim
    lead = x.shape[:-1]
    out_dtype = x.dtype
    x2d = x.reshape(-1, in_dim).astype(c_dtype)
    M = x2d.shape[0]

    c_bytes = jnp.dtype(c_dtype).itemsize
    o_bytes = jnp.dtype(out_dtype).itemsize
    two_bn = 2 * block_n

    cap = _vmem_capacity_bytes()
    budget = cap // 2                       # tile accounting budget
    vmem_limit = (cap * 3) // 4             # scoped-VMEM limit with headroom

    bm_auto, block_k = _choose_tiles(M, in_dim, block_n, c_bytes, o_bytes,
                                     budget, block_k=block_k)
    block_m = bm_auto if block_m is None else int(min(block_m, M))
    assert in_dim % block_k == 0, "block_k must divide in_dim"
    nk = in_dim // block_k
    m_tiles = pl.cdiv(M, block_m)

    # Grid ordering: re-stream whichever operand is smaller in total bytes.
    x_bytes = M * in_dim * c_bytes
    w_bytes = w.size * c_bytes
    if x_bytes > w_bytes:
        # m outermost: x tile resident across inner n steps, W re-streamed.
        grid = (m_tiles, n_tiles, nk)
        x_map = lambda i, j, k: (i, k)
        w_map = lambda i, j, k: (k, j)
        b_map = lambda i, j, k: (0, j)
        o_map = lambda i, j, k: (i, j)
    else:
        # n outermost: each fused-W tile DMA'd once, reused over all row tiles.
        grid = (n_tiles, m_tiles, nk)
        x_map = lambda j, i, k: (i, k)
        w_map = lambda j, i, k: (k, j)
        b_map = lambda j, i, k: (0, j)
        o_map = lambda j, i, k: (i, j)

    if nk == 1:
        kernel = functools.partial(_gated_mlp_kernel, block_n=block_n)
        scratch = []
    else:
        kernel = functools.partial(_gated_mlp_kernel_ktiled, block_n=block_n)
        scratch = [pltpu.VMEM((block_m, two_bn), jnp.float32)]

    cost = pl.CostEstimate(
        flops=2 * M * in_dim * 2 * out_dim_p + 4 * M * out_dim_p,
        transcendentals=M * out_dim_p,
        bytes_accessed=(x2d.size * c_bytes + w.size * c_bytes
                        + b.size * 4 + M * out_dim_p * o_bytes),
    )

    out = pl.pallas_call(
        kernel,
        out_shape=jax.ShapeDtypeStruct((M, out_dim_p), out_dtype),
        grid_spec=pltpu.PrefetchScalarGridSpec(
            num_scalar_prefetch=0,
            grid=grid,
            in_specs=[
                pl.BlockSpec((block_m, block_k), x_map),     # x rows
                pl.BlockSpec((block_k, two_bn), w_map),      # fused [W1|W2] tile
                pl.BlockSpec((1, two_bn), b_map),            # fused bias tile
            ],
            out_specs=pl.BlockSpec((block_m, block_n), o_map),
            scratch_shapes=scratch,
        ),
        compiler_params=pltpu.CompilerParams(
            dimension_semantics=("parallel", "parallel", "arbitrary"),
            vmem_limit_bytes=int(vmem_limit)),
        cost_estimate=cost,
    )(x2d, w, b)

    if out_dim_p != out_dim:
        out = out[:, :out_dim]
    return out.reshape(*lead, out_dim)


# --------------------------------------------------------------------------
# Reference
# --------------------------------------------------------------------------
def gated_mlp_ref(x, w1, b1, w2, b2):
    h1 = jnp.maximum(x @ w1 + b1, 0.0)
    h2 = jax.nn.sigmoid(x @ w2 + b2)
    return h1 * h2


# --------------------------------------------------------------------------
# Self-test
# --------------------------------------------------------------------------
if __name__ == "__main__":
    key = jax.random.PRNGKey(0)
    k0, k1, k2, k3 = jax.random.split(key, 4)

    def make_weights(k, in_dim, out_dim):
        kw1, kb1, kw2, kb2 = jax.random.split(k, 4)
        bound = 1.0 / (in_dim ** 0.5)
        w1 = jax.random.uniform(kw1, (in_dim, out_dim), minval=-bound,
                                maxval=bound, dtype=jnp.float32)
        b1 = jax.random.uniform(kb1, (out_dim,), minval=-bound,
                                maxval=bound, dtype=jnp.float32)
        w2 = jax.random.uniform(kw2, (in_dim, out_dim), minval=-bound,
                                maxval=bound, dtype=jnp.float32)
        b2 = jax.random.uniform(kb2, (out_dim,), minval=-bound,
                                maxval=bound, dtype=jnp.float32)
        return w1, b1, w2, b2

    # ---- 1) module-sized toy shapes: batch=2, seq=8, in_dim=32, out_dim=32 --
    batch, seq, in_dim, out_dim = 2, 8, 32, 32
    w1, b1, w2, b2 = make_weights(k0, in_dim, out_dim)
    x = jax.random.normal(k1, (batch, seq, in_dim), dtype=jnp.float32)
    ref = gated_mlp_ref(x, w1, b1, w2, b2)

    # f32 compute path: tight correctness check.
    p_f32 = prepare_gated_mlp(w1, b1, w2, b2, compute_dtype=jnp.float32)
    out = jax.block_until_ready(gated_mlp_apply(x, p_f32))
    assert out.shape == (batch, seq, out_dim)
    assert jnp.allclose(out, ref, atol=1e-5, rtol=1e-5)

    # default bf16 MXU path (f32 accumulation): loose check.
    p_bf = prepare_gated_mlp(w1, b1, w2, b2)          # weights prepped once
    out_bf = jax.block_until_ready(gated_mlp_apply(x, p_bf))
    assert jnp.allclose(out_bf, ref, atol=3e-2, rtol=3e-2)

    # ---- 2) K-tiled accumulator path + weight-resident (n-outer) ordering ---
    batch, seq, in_dim, out_dim = 2, 32, 256, 512
    w1, b1, w2, b2 = make_weights(k2, in_dim, out_dim)
    x = jax.random.normal(k2, (batch, seq, in_dim), dtype=jnp.float32)
    ref = gated_mlp_ref(x, w1, b1, w2, b2)
    params = prepare_gated_mlp(w1, b1, w2, b2)
    out = jax.block_until_ready(gated_mlp_apply(x, params, block_k=128))
    assert out.shape == (batch, seq, out_dim)
    assert jnp.allclose(out, ref, atol=3e-2, rtol=3e-2)

    # ---- 3) activation-heavy (m-outer) ordering with multiple row tiles -----
    batch, seq, in_dim, out_dim = 4, 512, 128, 128
    w1, b1, w2, b2 = make_weights(k3, in_dim, out_dim)
    x = jax.random.normal(k3, (batch, seq, in_dim), dtype=jnp.float32)
    ref = gated_mlp_ref(x, w1, b1, w2, b2)
    params = prepare_gated_mlp(w1, b1, w2, b2)
    out = jax.block_until_ready(gated_mlp_apply(x, params, block_m=1024))
    assert out.shape == (batch, seq, out_dim)
    assert jnp.allclose(out, ref, atol=3e-2, rtol=3e-2)

    print("KERNEL_OK")
</pallas_src>

<mosaic_0001>
module attributes {stable_mosaic.version = 11 : i64} {
  func.func @_gated_mlp_kernel(%arg0: i32, %arg1: i32, %arg2: i32, %arg3: memref<16x32xf32, #tpu.memory_space<vmem>>, %arg4: memref<32x256xf32, #tpu.memory_space<vmem>>, %arg5: memref<1x256xf32, #tpu.memory_space<vmem>>, %arg6: memref<16x128xf32, #tpu.memory_space<vmem>>) attributes {dimension_semantics = [#tpu.dimension_semantics<parallel>, #tpu.dimension_semantics<parallel>, #tpu.dimension_semantics<arbitrary>], iteration_bounds = array<i64: 1, 1, 1>, scalar_prefetch = 0 : i64, scratch_operands = 0 : i64, tpu.core_type = #tpu.core_type<tc>, window_params = [{transform_indices = @transform_0, window_bounds = array<i64: 16, 32>}, {transform_indices = @transform_1, window_bounds = array<i64: 32, 256>}, {transform_indices = @transform_2, window_bounds = array<i64: 1, 256>}, {transform_indices = @transform_3, window_bounds = array<i64: 16, 128>}]} {
    %c0 = arith.constant 0 : index
    %c0_0 = arith.constant 0 : index
    %0 = vector.load %arg3[%c0, %c0_0] : memref<16x32xf32, #tpu.memory_space<vmem>>, vector<16x32xf32>
    %c0_1 = arith.constant 0 : index
    %c0_2 = arith.constant 0 : index
    %1 = vector.load %arg4[%c0_1, %c0_2] : memref<32x256xf32, #tpu.memory_space<vmem>>, vector<32x256xf32>
    %cst = arith.constant dense<0.000000e+00> : vector<16x256xf32>
    %2 = tpu.matmul %0, %1, %cst {dimension_numbers = #tpu.dot_dimension_numbers<[1], [0], [0], [1], [0, 0, 1, 1], [], []>} : vector<16x32xf32>, vector<32x256xf32>, vector<16x256xf32> -> vector<16x256xf32>
    %c0_3 = arith.constant 0 : index
    %c0_4 = arith.constant 0 : index
    %3 = vector.load %arg5[%c0_3, %c0_4] : memref<1x256xf32, #tpu.memory_space<vmem>>, vector<1x256xf32>
    %4 = vector.broadcast %3 : vector<1x256xf32> to vector<16x256xf32>
    %5 = arith.addf %2, %4 : vector<16x256xf32>
    %6 = vector.extract_strided_slice %5 {offsets = [0, 0], sizes = [16, 128], strides = [1, 1]} : vector<16x256xf32> to vector<16x128xf32>
    %7 = vector.extract_strided_slice %5 {offsets = [0, 128], sizes = [16, 128], strides = [1, 1]} : vector<16x256xf32> to vector<16x128xf32>
    %cst_5 = arith.constant 0.000000e+00 : f32
    %8 = vector.broadcast %cst_5 : f32 to vector<16x128xf32>
    %9 = arith.maximumf %6, %8 : vector<16x128xf32>
    %cst_6 = arith.constant 5.000000e-01 : f32
    %10 = vector.broadcast %cst_6 : f32 to vector<16x128xf32>
    %11 = arith.mulf %10, %7 : vector<16x128xf32>
    %12 = math.tanh %11 : vector<16x128xf32>
    %cst_7 = arith.constant 1.000000e+00 : f32
    %13 = vector.broadcast %cst_7 : f32 to vector<16x128xf32>
    %14 = arith.addf %12, %13 : vector<16x128xf32>
    %cst_8 = arith.constant 5.000000e-01 : f32
    %15 = vector.broadcast %cst_8 : f32 to vector<16x128xf32>
    %16 = arith.mulf %15, %14 : vector<16x128xf32>
    %17 = arith.mulf %9, %16 : vector<16x128xf32>
    %c0_9 = arith.constant 0 : index
    %c0_10 = arith.constant 0 : index
    %18 = vector.load %arg6[%c0_9, %c0_10] : memref<16x128xf32, #tpu.memory_space<vmem>>, vector<16x128xf32>
    tpu.vector_store %arg6[%c0_9, %c0_10], %17 {strides = array<i32>} : memref<16x128xf32, #tpu.memory_space<vmem>>, vector<16x128xf32>,
    return
  }
  func.func @transform_0(%arg0: i32, %arg1: i32, %arg2: i32) -> (i32, i32) {
    %c0_i32 = arith.constant 0 : i32
    return %arg1, %arg2 : i32, i32
  }
  func.func @transform_1(%arg0: i32, %arg1: i32, %arg2: i32) -> (i32, i32) {
    %c0_i32 = arith.constant 0 : i32
    return %arg2, %arg0 : i32, i32
  }
  func.func @transform_2(%arg0: i32, %arg1: i32, %arg2: i32) -> (i32, i32) {
    %c0_i32 = arith.constant 0 : i32
    %c0_i32_0 = arith.constant 0 : i32
    return %c0_i32, %arg0 : i32, i32
  }
  func.func @transform_3(%arg0: i32, %arg1: i32, %arg2: i32) -> (i32, i32) {
    %c0_i32 = arith.constant 0 : i32
    return %arg1, %arg0 : i32, i32
  }
}

</mosaic_0001>

<llo_original>
// kernel: tpu_custom_call.1
$region0: #{tpu_custom_call.1}
  #allocation0 [shape = 'u32[]', space=smem, size = 0x4, offset = 0x4, fixed_abs, tag = 'smem constant byte address 0x4 - core index']
  #allocation1 [shape = 'u32[144,128]{1,0:T(1,128)}', space=vmem, size = 0x12000, scoped, tag = 'internal scratch']
  %s0 = inlined_call_operand.hbm [shape: f32[16,32], index: 0, kind: input, shape index: {}]
  %s1 = inlined_call_operand.hbm [shape: f32[32,256], index: 1, kind: input, shape index: {}]
  %s2 = inlined_call_operand.vmem [shape: f32[1,256], index: 2, kind: input, shape index: {}]
  %s3 = inlined_call_operand.hbm [shape: f32[16,128], index: 3, kind: output, shape index: {}]
  %s4 = sld [smem:[#allocation0]]
  $region30: #{tpu_custom_call.1} parent=0
    _
  %s6 = ssub.s32 1, %s4
  %s7 = scalar_select 0, %s6, %s4
  $region1: #{tpu_custom_call.1} parent=0
    #allocation2 [shape = 'u8[8192]{0}', space=vmem, size = 0x2000, scoped, tag = 'input window, operand 0, single buffered']
    #allocation3 [shape = 's32[1]{0}', space=sflag, size = 0x4, scoped, tag = 'scoped memory for tpu_custom_call.1']
    #allocation4 [shape = 's32[1]{0}', space=sflag, size = 0x4, scoped, tag = 'scoped memory for tpu_custom_call.1']
    #allocation5 [shape = 'u8[32768]{0}', space=vmem, size = 0x8000, scoped, tag = 'input window, operand 1, single buffered']
    #allocation6 [shape = 's32[1]{0}', space=sflag, size = 0x4, scoped, tag = 'scoped memory for tpu_custom_call.1']
    #allocation7 [shape = 'u8[8192]{0}', space=vmem, size = 0x2000, scoped, tag = 'output window, operand 0, single buffered']
    %8 = vsyncpa [#allocation3], 0
    %9 = vsyncpa [#allocation6], 0
    %10 = vsyncpa [#allocation4], 0
    // Predicated region
    $region2: #{tpu_custom_call.1} parent=1 // pred_check
      _
    $region3: #{tpu_custom_call.1} parent=1 // pred_check_branch
      %12 = sbr.rel (0) target = $region5
    $region4: #{tpu_custom_call.1} parent=1 // pred_region
      %s14 = ssub.s32 256, 256
      %15 = vsyncadd [#allocation3], %s14
      %s16 = sshll.u32 [#allocation2], 4
      %s17 = int_to_ptr.vmem [resolvable:$true] %s16
      %22 = dma.hbm_to_vmem [thread:$0]  %s0, 256, %s17, [#allocation3], 128, 128, 8
    $region5: #{tpu_custom_call.1} parent=1 // pred_fallthru
      _
    // Predicated region
    $region6: #{tpu_custom_call.1} parent=1 // pred_check
      _
    $region7: #{tpu_custom_call.1} parent=1 // pred_check_branch
      %24 = sbr.rel (0) target = $region9
    $region8: #{tpu_custom_call.1} parent=1 // pred_region
      %s26 = ssub.s32 1024, 1024
      %27 = vsyncadd [#allocation6], %s26
      %s28 = sshll.u32 [#allocation5], 4
      %s29 = int_to_ptr.vmem [resolvable:$true] %s28
      %34 = dma.hbm_to_vmem [thread:$0]  %s1, 1024, %s29, [#allocation6], 256, 256, 16
    $region9: #{tpu_custom_call.1} parent=1 // pred_fallthru
      _
    // Predicated region
    $region10: #{tpu_custom_call.1} parent=1 // pred_check
      _
    $region11: #{tpu_custom_call.1} parent=1 // pred_check_branch
      %36 = sbr.rel (0) target = $region13
    $region12: #{tpu_custom_call.1} parent=1 // pred_region
      _
    $region13: #{tpu_custom_call.1} parent=1 // pred_fallthru
      _
    // Predicated region
    $region14: #{tpu_custom_call.1} parent=1 // pred_check
      _
    $region15: #{tpu_custom_call.1} parent=1 // pred_check_branch
      %38 = sbr.rel (0) target = $region17
    $region16: #{tpu_custom_call.1} parent=1 // pred_region
      %39 = dma.done [#allocation3], 256
    $region17: #{tpu_custom_call.1} parent=1 // pred_fallthru
      _
    // Predicated region
    $region18: #{tpu_custom_call.1} parent=1 // pred_check
      _
    $region19: #{tpu_custom_call.1} parent=1 // pred_check_branch
      %41 = sbr.rel (0) target = $region21
    $region20: #{tpu_custom_call.1} parent=1 // pred_region
      %42 = dma.done [#allocation6], 1024
    $region21: #{tpu_custom_call.1} parent=1 // pred_fallthru
      _
    %v43 = vld [vmem:[#allocation2] sm:$0xff]
    %v44 = vld [vmem:[#allocation2 + $0x8] sm:$0xff]
    %v45 = vld [vmem:[#allocation5] sm:$0xff]
    %v46 = vld [vmem:[#allocation5 + $0x8] sm:$0xff]
    %v47 = vld [vmem:[#allocation5 + $0x10] sm:$0xff]
    %v48 = vld [vmem:[#allocation5 + $0x18] sm:$0xff]
    %v49 = vld [vmem:[#allocation5 + $0x20] sm:$0xff]
    %v50 = vld [vmem:[#allocation5 + $0x28] sm:$0xff]
    %v51 = vld [vmem:[#allocation5 + $0x30] sm:$0xff]
    %v52 = vld [vmem:[#allocation5 + $0x38] sm:$0xff]
    %v53 = vld [vmem:[%s2] sm:$0x3]
    %v55 = vlaneseq
    %v56 = vshrl.u32 %v55, 7
    %v57 = vsub.s32 0, %v56
    %v58 = vrot.slane %v53, %v57
    %v59 = vlaneseq
    %v60 = vshrl.u32 %v59, 7
    %v61 = vsub.s32 1, %v60
    %v62 = vrot.slane %v53, %v61
    %vm65 = vcmask 261120
    %v67 = vsel %vm65, %v43, 0
    %v70 = vsel %vm65, %v44, 0
    %72 = vmatprep.subr.mxu0 %v46
    %73 = vmatpush1.msra.mxu0 %v45
    %74 = vmatprep.subr.mxu0 %v48
    %75 = vmatpush1.msra.mxu0 %v47
    %76 = vmatprep.subr.mxu0 %v50
    %77 = vmatpush1.msra.mxu0 %v49
    %78 = vmatprep.subr.mxu0 %v52
    %79 = vmatpush1.msra.mxu0 %v51
    %80 = vmatprep.subr.mxu0 0.0
    %81 = vmatpush1.msra.mxu0 0.0
    %82 = vmatprep.subr.mxu0 0.0
    %83 = vmatpush1.msra.mxu0 0.0
    %84 = vmatprep.subr.mxu0 0.0
    %85 = vmatpush1.msra.mxu0 0.0
    %86 = vmatprep.subr.mxu0 0.0
    %87 = vmatpush1.msra.mxu0 0.0
    %88 = vmatprep.subr.mxu0 0.0
    %89 = vmatpush1.msra.mxu0 0.0
    %90 = vmatprep.subr.mxu0 0.0
    %91 = vmatpush1.msra.mxu0 0.0
    %92 = vmatprep.subr.mxu0 0.0
    %93 = vmatpush1.msra.mxu0 0.0
    %94 = vmatprep.subr.mxu0 0.0
    %95 = vmatpush1.msra.mxu0 0.0
    %96 = vmatprep.subr.mxu0 0.0
    %97 = vmatpush1.msra.mxu0 0.0
    %98 = vmatprep.subr.mxu0 0.0
    %99 = vmatpush1.msra.mxu0 0.0
    %100 = vmatprep.subr.mxu0 0.0
    %101 = vmatpush1.msra.mxu0 0.0
    %102 = vmatprep.subr.mxu0 0.0
    %103 = vmatpush1.msra.mxu0 0.0
    %104 = vmatprep.subr.mxu0 0.0
    %105 = vmatpush1.msra.mxu0 0.0
    %106 = vmatprep.subr.mxu0 0.0
    %107 = vmatpush1.msra.mxu0 0.0
    %108 = vmatprep.subr.mxu0 0.0
    %109 = vmatpush1.msra.mxu0 0.0
    %110 = vmatprep.subr.mxu0 0.0
    %111 = vmatpush1.msra.mxu0 0.0
    %112 = vmatprep.subr.mxu0 0.0
    %113 = vmatpush1.msra.mxu0 0.0
    %114 = vmatprep.subr.mxu0 0.0
    %115 = vmatpush1.msra.mxu0 0.0
    %116 = vmatprep.subr.mxu0 0.0
    %117 = vmatpush1.msra.mxu0 0.0
    %118 = vmatprep.subr.mxu0 0.0
    %119 = vmatpush1.msra.mxu0 0.0
    %120 = vmatprep.subr.mxu0 0.0
    %121 = vmatpush1.msra.mxu0 0.0
    %122 = vmatprep.subr.mxu0 0.0
    %123 = vmatpush1.msra.mxu0 0.0
    %124 = vmatprep.subr.mxu0 0.0
    %125 = vmatpush1.msra.mxu0 0.0
    %126 = vmatprep.subr.mxu0 0.0
    %127 = vmatpush1.msra.mxu0 0.0
    %128 = vmatprep.subr.mxu0 0.0
    %129 = vmatpush1.msra.mxu0 0.0
    %130 = vmatprep.subr.mxu0 0.0
    %131 = vmatpush1.msra.mxu0 0.0
    %132 = vmatprep.subr.mxu0 0.0
    %133 = vmatpush1.msra.mxu0 0.0
    %134 = vmatprep.subr.mxu0 0.0
    %135 = vmatpush1.msra.mxu0 0.0
    %136 = vmatprep.mubr.f32.mxu0 0.0
    %137 = vmatmul.mubr.f32.gmra.mrb[0].mxu0 %v67
    %v138 = vpop.f32.mrb[0].mxu0
    %v139 = vadd.f32 %v58, %v138
    %v140 = vpop.f32.mrb[0].mxu0
    %v141 = vadd.f32 %v62, %v140
    %142 = vmatprep.mubr.f32.mxu0 0.0
    %143 = vmatmul.mubr.f32.gmra.mrb[0].mxu0 %v70
    %v144 = vpop.f32.mrb[0].mxu0
    %v145 = vadd.f32 %v58, %v144
    %v146 = vpop.f32.mrb[0].mxu0
    %v147 = vadd.f32 %v62, %v146
    %148 = vdwg.mxu0
    %v149 = vmax.f32 %v139, 0.0
    %v150 = vmax.f32 %v145, 0.0
    %v151 = vmul.f32 %v141, 0.5
    %v152 = vmul.f32 %v147, 0.5
    %v153 = vtanh.pop %v151
    %v154 = vtanh.pop %v152
    %v155 = vadd.f32 %v153, 1.0
    %v156 = vadd.f32 %v154, 1.0
    %v157 = vmul.f32 %v155, 0.5
    %v158 = vmul.f32 %v156, 0.5
    %v159 = vmul.f32 %v149, %v157
    %v160 = vmul.f32 %v150, %v158
    %161 = vst [vmem:[#allocation7] sm:$0xff] %v159
    %162 = vst [vmem:[#allocation7 + $0x8] sm:$0xff] %v160
    // Predicated region
    $region22: #{tpu_custom_call.1} parent=1 // pred_check
      _
    $region23: #{tpu_custom_call.1} parent=1 // pred_check_branch
      %164 = sbr.rel (0) target = $region25
    $region24: #{tpu_custom_call.1} parent=1 // pred_region
      %s166 = ssub.s32 256, 256
      %167 = vsyncadd [#allocation4], %s166
      %s168 = sshll.u32 [#allocation7], 4
      %s169 = int_to_ptr.vmem [resolvable:$true] %s168
      %174 = dma.vmem_to_hbm [thread:$0]  %s169, 256, %s3, [#allocation4], 128, 128, 8
    $region25: #{tpu_custom_call.1} parent=1 // pred_fallthru
      _
    // Predicated region
    $region26: #{tpu_custom_call.1} parent=1 // pred_check
      _
    $region27: #{tpu_custom_call.1} parent=1 // pred_check_branch
      %176 = sbr.rel (0) target = $region29
    $region28: #{tpu_custom_call.1} parent=1 // pred_region
      %177 = dma.done [#allocation4], 256
    $region29: #{tpu_custom_call.1} parent=1 // pred_fallthru
      _
    %178 = vsyncpa [#allocation3], 1
    %179 = vsyncpa [#allocation6], 1
    %180 = vsyncpa [#allocation4], 1

</llo_original>
